<compile_context>
chip_gen: v5e
topology: v5e:2x2
jax: 0.10.0
libtpu: 0.0.40
codegen_flags: <defaults>
</compile_context>

<pallas_src>
import functools

import jax
import jax.numpy as jnp
import numpy as np
from jax import lax
from jax.experimental import pallas as pl
from jax.experimental.pallas import tpu as pltpu


def divfree_kernel(xT_ref, params_ref, out_ref, *, chunk):
    # xT_ref:     (2, TM)   -- samples on the lane axis
    # params_ref: (HP, 8)   -- packed parameters (see wrapper)
    # out_ref:    (3, TM)   -- rows [y, dy/dx1, -dy/dx0], lane-dense
    #
    # Parameter columns (HP, 1), broadcast over lanes inside each chunk.
    w1c0 = params_ref[:, 0:1]
    w1c1 = params_ref[:, 1:2]
    b1 = params_ref[:, 2:3]
    w2 = params_ref[:, 3:4]
    wg0 = params_ref[:, 4:5]          # W2 * W1[:, 0]
    wg1 = params_ref[:, 5:6]          # W2 * W1[:, 1]
    # Scalars stashed in column 6 (rows 0..2), read as (1, 1) broadcastables.
    b2 = params_ref[0:1, 6:7]
    swg0 = params_ref[1:2, 6:7]       # sum_k W2[k] * W1[k, 0]
    swg1 = params_ref[2:3, 6:7]       # sum_k W2[k] * W1[k, 1]

    tm = xT_ref.shape[1]
    n_chunks = tm // chunk            # static

    def body(c, carry):
        off = pl.multiple_of(c * chunk, chunk)
        x0 = xT_ref[0:1, pl.ds(off, chunk)]                    # (1, chunk)
        x1 = xT_ref[1:2, pl.ds(off, chunk)]                    # (1, chunk)

        # Hidden layer: z[k, n] = W1[k,0]*x0[n] + W1[k,1]*x1[n] + b1[k]  (VPU)
        z = w1c0 * x0 + w1c1 * x1 + b1                          # (HP, chunk)
        h = jnp.tanh(z)                                         # EUP

        # y = W2 . h + b2   (sublane reduction over HP on the XLU)
        y = jnp.sum(h * w2, axis=0, keepdims=True) + b2         # (1, chunk)

        # dy/dx_j = sum_k wg_j[k] * (1 - h_k^2) = swg_j - sum_k wg_j[k] * h_k^2
        h2 = h * h                                               # (HP, chunk)
        g0 = swg0 - jnp.sum(h2 * wg0, axis=0, keepdims=True)     # (1, chunk)
        g1 = swg1 - jnp.sum(h2 * wg1, axis=0, keepdims=True)     # (1, chunk)

        out_ref[0:1, pl.ds(off, chunk)] = y                      # y
        out_ref[1:2, pl.ds(off, chunk)] = g1                     # dy/dx1
        out_ref[2:3, pl.ds(off, chunk)] = -g0                    # -dy/dx0
        return carry

    # Fully unrolled (static trip count): each chunk's chain + its stores stay
    # short-lived, keeping vreg pressure bounded while the EUP (tanh) binds.
    lax.fori_loop(0, n_chunks, body, 0, unroll=True)


def _round_up(a, m):
    return ((a + m - 1) // m) * m


def _tensorcores_per_device():
    """Best-effort count of TensorCores visible to one jax device."""
    try:
        kind = (jax.devices()[0].device_kind or "").lower()
    except Exception:
        return 1
    if "v7" in kind:
        return 2
    if "v4" in kind or "v5p" in kind:   # megacore parts
        return 2
    return 1


def _select_tiling(N, tm_max, n_cores):
    n128 = _round_up(max(N, 1), 128)
    tm = max(128, (min(tm_max, n128) // 128) * 128)
    if n_cores >= 2 and n128 >= 256:
        # Multi-TensorCore chip: make an even number of grid steps so the
        # "parallel" axis load-balances across both cores.
        steps = -(-n128 // tm)
        if steps % 2:
            steps += 1
        tm = _round_up(-(-n128 // steps), 128)
    if tm >= 512:
        tm = _round_up(tm, 512)   # keep the inner chunk size at 512 lanes
    chunk = 512 if tm % 512 == 0 else (256 if tm % 256 == 0 else 128)
    n_pad = _round_up(N, tm)
    return tm, chunk, n_pad


def divfree_2d(x, w1, b1, w2, b2, *, tm=8192):
    """x: (N, 2) f32 (or already-transposed (2, N)); w1: (H, 2); b1: (H,);
    w2: (H,); b2: scalar.  Returns (y, u, v), each (N, 1) f32, where
    u = dy/dx1 and v = -dy/dx0."""
    x = jnp.asarray(x)
    if x.ndim != 2:
        raise ValueError("x must be 2-D")
    if x.shape[0] == 2 and x.shape[1] != 2:
        xT = x.astype(jnp.float32)                 # already (2, N)
    elif x.shape[1] == 2:
        xT = x.astype(jnp.float32).T               # (N, 2) -> (2, N)
    else:
        raise ValueError("x must be (N, 2) or (2, N)")
    N = xT.shape[1]
    H = w1.shape[0]

    n_cores = _tensorcores_per_device()
    tm, chunk, n_pad = _select_tiling(N, tm, n_cores)
    if n_pad != N:
        xT = jnp.pad(xT, ((0, 0), (0, n_pad - N)))  # zero-pad tail (sliced off)

    # Pack all parameters into one (HP, 8) f32 array.  HP zero-pads the hidden
    # dim (padded rows contribute tanh(0)*0 = 0 to every reduction).
    HP = max(8, _round_up(H, 8))
    w1f = w1.astype(jnp.float32)
    b1f = jnp.reshape(b1, (H,)).astype(jnp.float32)
    w2f = jnp.reshape(w2, (H,)).astype(jnp.float32)
    b2f = jnp.reshape(b2, ()).astype(jnp.float32)
    wg0 = w2f * w1f[:, 0]                           # (H,)
    wg1 = w2f * w1f[:, 1]                           # (H,)
    params = jnp.zeros((HP, 8), jnp.float32)
    params = params.at[:H, 0].set(w1f[:, 0])
    params = params.at[:H, 1].set(w1f[:, 1])
    params = params.at[:H, 2].set(b1f)
    params = params.at[:H, 3].set(w2f)
    params = params.at[:H, 4].set(wg0)
    params = params.at[:H, 5].set(wg1)
    params = params.at[0, 6].set(b2f)
    params = params.at[1, 6].set(jnp.sum(wg0))
    params = params.at[2, 6].set(jnp.sum(wg1))

    kernel = functools.partial(divfree_kernel, chunk=chunk)

    out = pl.pallas_call(
        kernel,
        out_shape=jax.ShapeDtypeStruct((3, n_pad), jnp.float32),
        grid_spec=pltpu.PrefetchScalarGridSpec(
            num_scalar_prefetch=0,
            grid=(n_pad // tm,),
            in_specs=[
                pl.BlockSpec((2, tm), lambda i: (0, i)),    # x^T tile, lane-dense
                pl.BlockSpec((HP, 8), lambda i: (0, 0)),    # packed parameters
            ],
            out_specs=pl.BlockSpec((3, tm), lambda i: (0, i)),  # fused output
        ),
        compiler_params=pltpu.CompilerParams(
            dimension_semantics=("parallel",),
        ),
    )(xT, params)

    y = out[0, :N].reshape(N, 1)
    u = out[1, :N].reshape(N, 1)
    v = out[2, :N].reshape(N, 1)
    return y, u, v


def _reference(x, w1, b1, w2, b2):
    """Pure-JAX reference: value + autodiff input-gradient (mirrors torch.autograd.grad)."""
    def base_net_scalar(xi):
        h = jnp.tanh(w1 @ xi + b1)       # (H,)
        return jnp.dot(w2, h) + b2       # scalar

    y = jax.vmap(base_net_scalar)(x)[:, None]        # (N, 1)
    dydx = jax.vmap(jax.grad(base_net_scalar))(x)    # (N, 2)
    return y, dydx[:, 1:2], -dydx[:, 0:1]


if __name__ == "__main__":
    N, H = 512, 32
    key = jax.random.PRNGKey(0)
    kx, k1, k2, k3, k4 = jax.random.split(key, 5)

    x = jax.random.normal(kx, (N, 2), dtype=jnp.float32)

    # Deterministic "init" of the base net (Linear(2,H) -> tanh -> Linear(H,1)).
    w1 = jax.random.normal(k1, (H, 2), dtype=jnp.float32) * 0.5   # torch Linear weight (H, 2)
    b1 = jax.random.normal(k2, (H,), dtype=jnp.float32) * 0.1
    w2 = jax.random.normal(k3, (H,), dtype=jnp.float32) * 0.5     # torch Linear weight (1, H) -> (H,)
    b2 = jax.random.normal(k4, (), dtype=jnp.float32) * 0.1

    y, u, v = divfree_2d(x, w1, b1, w2, b2)
    jax.block_until_ready((y, u, v))

    y_ref, u_ref, v_ref = _reference(x, w1, b1, w2, b2)
    np.testing.assert_allclose(np.asarray(y), np.asarray(y_ref), rtol=1e-5, atol=1e-5)
    np.testing.assert_allclose(np.asarray(u), np.asarray(u_ref), rtol=1e-5, atol=1e-5)
    np.testing.assert_allclose(np.asarray(v), np.asarray(v_ref), rtol=1e-5, atol=1e-5)

    print("KERNEL_OK")
</pallas_src>

<mosaic_0001>
module attributes {stable_mosaic.version = 11 : i64} {
  func.func @divfree_kernel(%arg0: i32, %arg1: memref<2x512xf32, #tpu.memory_space<vmem>>, %arg2: memref<32x8xf32, #tpu.memory_space<vmem>>, %arg3: memref<3x512xf32, #tpu.memory_space<vmem>>) attributes {dimension_semantics = [#tpu.dimension_semantics<parallel>], iteration_bounds = array<i64: 1>, scalar_prefetch = 0 : i64, scratch_operands = 0 : i64, tpu.core_type = #tpu.core_type<tc>, window_params = [{transform_indices = @transform_0, window_bounds = array<i64: 2, 512>}, {pipeline_mode = #tpu.pipeline_mode<synchronous>, transform_indices = @transform_1, window_bounds = array<i64: 32, 8>}, {transform_indices = @transform_2, window_bounds = array<i64: 3, 512>}]} {
    %c0 = arith.constant 0 : index
    %c0_0 = arith.constant 0 : index
    %0 = vector.load %arg2[%c0, %c0_0] : memref<32x8xf32, #tpu.memory_space<vmem>>, vector<32x1xf32>
    %c0_1 = arith.constant 0 : index
    %c1 = arith.constant 1 : index
    %1 = vector.load %arg2[%c0_1, %c1] : memref<32x8xf32, #tpu.memory_space<vmem>>, vector<32x1xf32>
    %c0_2 = arith.constant 0 : index
    %c2 = arith.constant 2 : index
    %2 = vector.load %arg2[%c0_2, %c2] : memref<32x8xf32, #tpu.memory_space<vmem>>, vector<32x1xf32>
    %c0_3 = arith.constant 0 : index
    %c3 = arith.constant 3 : index
    %3 = vector.load %arg2[%c0_3, %c3] : memref<32x8xf32, #tpu.memory_space<vmem>>, vector<32x1xf32>
    %c0_4 = arith.constant 0 : index
    %c4 = arith.constant 4 : index
    %4 = vector.load %arg2[%c0_4, %c4] : memref<32x8xf32, #tpu.memory_space<vmem>>, vector<32x1xf32>
    %c0_5 = arith.constant 0 : index
    %c5 = arith.constant 5 : index
    %5 = vector.load %arg2[%c0_5, %c5] : memref<32x8xf32, #tpu.memory_space<vmem>>, vector<32x1xf32>
    %c0_6 = arith.constant 0 : index
    %c6 = arith.constant 6 : index
    %6 = vector.load %arg2[%c0_6, %c6] : memref<32x8xf32, #tpu.memory_space<vmem>>, vector<1x1xf32>
    %c1_7 = arith.constant 1 : index
    %c6_8 = arith.constant 6 : index
    %7 = vector.load %arg2[%c1_7, %c6_8] : memref<32x8xf32, #tpu.memory_space<vmem>>, vector<1x1xf32>
    %c2_9 = arith.constant 2 : index
    %c6_10 = arith.constant 6 : index
    %8 = vector.load %arg2[%c2_9, %c6_10] : memref<32x8xf32, #tpu.memory_space<vmem>>, vector<1x1xf32>
    %c0_i32 = arith.constant 0 : i32
    %c512_i32 = arith.constant 512 : i32
    %9 = arith.muli %c0_i32, %c512_i32 : i32
    %10 = tpu.assume_multiple %9, 512 : i32
    %c0_11 = arith.constant 0 : index
    %11 = arith.index_cast %10 : i32 to index
    %12 = vector.load %arg1[%c0_11, %11] : memref<2x512xf32, #tpu.memory_space<vmem>>, vector<1x512xf32>
    %c1_12 = arith.constant 1 : index
    %13 = arith.index_cast %10 : i32 to index
    %14 = vector.load %arg1[%c1_12, %13] : memref<2x512xf32, #tpu.memory_space<vmem>>, vector<1x512xf32>
    %15 = vector.broadcast %0 : vector<32x1xf32> to vector<32x512xf32>
    %16 = vector.broadcast %12 : vector<1x512xf32> to vector<32x512xf32>
    %17 = arith.mulf %15, %16 : vector<32x512xf32>
    %18 = vector.broadcast %1 : vector<32x1xf32> to vector<32x512xf32>
    %19 = vector.broadcast %14 : vector<1x512xf32> to vector<32x512xf32>
    %20 = arith.mulf %18, %19 : vector<32x512xf32>
    %21 = arith.addf %17, %20 : vector<32x512xf32>
    %22 = vector.broadcast %2 : vector<32x1xf32> to vector<32x512xf32>
    %23 = arith.addf %21, %22 : vector<32x512xf32>
    %24 = math.tanh %23 : vector<32x512xf32>
    %25 = vector.broadcast %3 : vector<32x1xf32> to vector<32x512xf32>
    %26 = arith.mulf %24, %25 : vector<32x512xf32>
    %cst = arith.constant dense<0.000000e+00> : vector<512xf32>
    %27 = vector.multi_reduction <add>, %26, %cst [0] : vector<32x512xf32> to vector<512xf32>
    %28 = vector.shape_cast %27 : vector<512xf32> to vector<1x512xf32>
    %29 = vector.broadcast %6 : vector<1x1xf32> to vector<1x512xf32>
    %30 = arith.addf %28, %29 : vector<1x512xf32>
    %31 = arith.mulf %24, %24 : vector<32x512xf32>
    %32 = vector.broadcast %4 : vector<32x1xf32> to vector<32x512xf32>
    %33 = arith.mulf %31, %32 : vector<32x512xf32>
    %cst_13 = arith.constant dense<0.000000e+00> : vector<512xf32>
    %34 = vector.multi_reduction <add>, %33, %cst_13 [0] : vector<32x512xf32> to vector<512xf32>
    %35 = vector.shape_cast %34 : vector<512xf32> to vector<1x512xf32>
    %36 = vector.broadcast %7 : vector<1x1xf32> to vector<1x512xf32>
    %37 = arith.subf %36, %35 : vector<1x512xf32>
    %38 = vector.broadcast %5 : vector<32x1xf32> to vector<32x512xf32>
    %39 = arith.mulf %31, %38 : vector<32x512xf32>
    %cst_14 = arith.constant dense<0.000000e+00> : vector<512xf32>
    %40 = vector.multi_reduction <add>, %39, %cst_14 [0] : vector<32x512xf32> to vector<512xf32>
    %41 = vector.shape_cast %40 : vector<512xf32> to vector<1x512xf32>
    %42 = vector.broadcast %8 : vector<1x1xf32> to vector<1x512xf32>
    %43 = arith.subf %42, %41 : vector<1x512xf32>
    %c0_15 = arith.constant 0 : index
    %44 = arith.index_cast %10 : i32 to index
    %45 = vector.load %arg3[%c0_15, %44] : memref<3x512xf32, #tpu.memory_space<vmem>>, vector<1x512xf32>
    tpu.vector_store %arg3[%c0_15, %44], %30 {strides = array<i32>} : memref<3x512xf32, #tpu.memory_space<vmem>>, vector<1x512xf32>,
    %c1_16 = arith.constant 1 : index
    %46 = arith.index_cast %10 : i32 to index
    %47 = vector.load %arg3[%c1_16, %46] : memref<3x512xf32, #tpu.memory_space<vmem>>, vector<1x512xf32>
    tpu.vector_store %arg3[%c1_16, %46], %43 {strides = array<i32>} : memref<3x512xf32, #tpu.memory_space<vmem>>, vector<1x512xf32>,
    %cst_17 = arith.constant 0.000000e+00 : f32
    %48 = vector.broadcast %cst_17 : f32 to vector<1x512xf32>
    %49 = arith.subf %48, %37 : vector<1x512xf32>
    %c2_18 = arith.constant 2 : index
    %50 = arith.index_cast %10 : i32 to index
    %51 = vector.load %arg3[%c2_18, %50] : memref<3x512xf32, #tpu.memory_space<vmem>>, vector<1x512xf32>
    tpu.vector_store %arg3[%c2_18, %50], %49 {strides = array<i32>} : memref<3x512xf32, #tpu.memory_space<vmem>>, vector<1x512xf32>,
    %c1_i32 = arith.constant 1 : i32
    return
  }
  func.func @transform_0(%arg0: i32) -> (i32, i32) {
    %c0_i32 = arith.constant 0 : i32
    %c0_i32_0 = arith.constant 0 : i32
    return %c0_i32, %arg0 : i32, i32
  }
  func.func @transform_1(%arg0: i32) -> (i32, i32) {
    %c0_i32 = arith.constant 0 : i32
    %c0_i32_0 = arith.constant 0 : i32
    %c0_i32_1 = arith.constant 0 : i32
    return %c0_i32, %c0_i32_0 : i32, i32
  }
  func.func @transform_2(%arg0: i32) -> (i32, i32) {
    %c0_i32 = arith.constant 0 : i32
    %c0_i32_0 = arith.constant 0 : i32
    return %c0_i32, %arg0 : i32, i32
  }
}

</mosaic_0001>

<llo_original>
// kernel: tpu_custom_call.1
$region0: #{tpu_custom_call.1}
  #allocation0 [shape = 'u32[]', space=smem, size = 0x4, offset = 0x4, fixed_abs, tag = 'smem constant byte address 0x4 - core index']
  #allocation1 [shape = 'u32[72,128]{1,0:T(1,128)}', space=vmem, size = 0x9000, scoped, tag = 'internal scratch']
  %s0 = inlined_call_operand.vmem [shape: f32[2,512], index: 0, kind: input, shape index: {}]
  %s1 = inlined_call_operand.vmem [shape: f32[32,8], index: 1, kind: input, shape index: {}]
  %s2 = inlined_call_operand.hbm [shape: f32[3,512], index: 2, kind: output, shape index: {}]
  %s3 = sld [smem:[#allocation0]]
  $region18: #{tpu_custom_call.1} parent=0
    _
  %s5 = ssub.s32 1, %s3
  %s6 = scalar_select 0, %s5, %s3
  $region1: #{tpu_custom_call.1} parent=0
    #allocation2 [shape = 'u8[8192]{0}', space=vmem, size = 0x2000, scoped, tag = 'output window, operand 0, single buffered']
    #allocation3 [shape = 's32[1]{0}', space=sflag, size = 0x4, scoped, tag = 'scoped memory for tpu_custom_call.1']
    %7 = vsyncpa [#allocation3], 0
    // Predicated region
    $region2: #{tpu_custom_call.1} parent=1 // pred_check
      _
    $region3: #{tpu_custom_call.1} parent=1 // pred_check_branch
      %9 = sbr.rel (0) target = $region5
    $region4: #{tpu_custom_call.1} parent=1 // pred_region
      _
    $region5: #{tpu_custom_call.1} parent=1 // pred_fallthru
      _
    // Predicated region
    $region6: #{tpu_custom_call.1} parent=1 // pred_check
      _
    $region7: #{tpu_custom_call.1} parent=1 // pred_check_branch
      %11 = sbr.rel (0) target = $region9
    $region8: #{tpu_custom_call.1} parent=1 // pred_region
      _
    $region9: #{tpu_custom_call.1} parent=1 // pred_fallthru
      _
    %v12 = vld [vmem:[%s1] sm:$0xff]
    %v13 = vld [vmem:[%s1 + $0x8] sm:$0xff]
    %v14 = vld [vmem:[%s1 + $0x10] sm:$0xff]
    %v15 = vld [vmem:[%s1 + $0x18] sm:$0xff]
    %v16 = vld [vmem:[%s1] sm:$0x1]
    %v17 = vld [vmem:[%s1 + $0x1] sm:$0x1]
    %v18 = vld [vmem:[%s1 + $0x2] sm:$0x1]
    %v19 = vld [vmem:[%s0] ss:$2 sm:$0xf]
    %s20 = scalar_lea.vmem %s0, 1
    %v21 = vld [vmem:[%s20] ss:$2 sm:$0xf]
    %23 = vset.pattern.permute.xlu0 0
    %24 = vperm.xlu0 %23, %v12
    %v25 = vpop.permute.xlu0 %24
    %28 = vset.pattern.permute.xlu0 0
    %29 = vperm.xlu0 %28, %v13
    %v30 = vpop.permute.xlu0 %29
    %33 = vset.pattern.permute.xlu0 0
    %34 = vperm.xlu0 %33, %v14
    %v35 = vpop.permute.xlu0 %34
    %38 = vset.pattern.permute.xlu0 0
    %39 = vperm.xlu0 %38, %v15
    %v40 = vpop.permute.xlu0 %39
    %v43 = vperm.slane %v19, 0
    %v44 = vperm.slane %v19, 1
    %v45 = vperm.slane %v19, 2
    %v46 = vperm.slane %v19, 3
    %v51 = vmul.f32 %v25, %v43
    %v52 = vmul.f32 %v25, %v44
    %v53 = vmul.f32 %v25, %v45
    %v54 = vmul.f32 %v25, %v46
    %v55 = vmul.f32 %v30, %v43
    %v56 = vmul.f32 %v30, %v44
    %v57 = vmul.f32 %v30, %v45
    %v58 = vmul.f32 %v30, %v46
    %v59 = vmul.f32 %v35, %v43
    %v60 = vmul.f32 %v35, %v44
    %v61 = vmul.f32 %v35, %v45
    %v62 = vmul.f32 %v35, %v46
    %v63 = vmul.f32 %v40, %v43
    %v64 = vmul.f32 %v40, %v44
    %v65 = vmul.f32 %v40, %v45
    %v66 = vmul.f32 %v40, %v46
    %67 = vset.pattern.permute.xlu0 1
    %68 = vperm.xlu0 %67, %v12
    %v69 = vpop.permute.xlu0 %68
    %71 = vset.pattern.permute.xlu0 1
    %72 = vperm.xlu0 %71, %v13
    %v73 = vpop.permute.xlu0 %72
    %75 = vset.pattern.permute.xlu0 1
    %76 = vperm.xlu0 %75, %v14
    %v77 = vpop.permute.xlu0 %76
    %79 = vset.pattern.permute.xlu0 1
    %80 = vperm.xlu0 %79, %v15
    %v81 = vpop.permute.xlu0 %80
    %v84 = vperm.slane %v21, 0
    %v85 = vperm.slane %v21, 1
    %v86 = vperm.slane %v21, 2
    %v87 = vperm.slane %v21, 3
    %v92 = vmul.f32 %v69, %v84
    %v93 = vmul.f32 %v69, %v85
    %v94 = vmul.f32 %v69, %v86
    %v95 = vmul.f32 %v69, %v87
    %v96 = vmul.f32 %v73, %v84
    %v97 = vmul.f32 %v73, %v85
    %v98 = vmul.f32 %v73, %v86
    %v99 = vmul.f32 %v73, %v87
    %v100 = vmul.f32 %v77, %v84
    %v101 = vmul.f32 %v77, %v85
    %v102 = vmul.f32 %v77, %v86
    %v103 = vmul.f32 %v77, %v87
    %v104 = vmul.f32 %v81, %v84
    %v105 = vmul.f32 %v81, %v85
    %v106 = vmul.f32 %v81, %v86
    %v107 = vmul.f32 %v81, %v87
    %v108 = vadd.f32 %v51, %v92
    %v109 = vadd.f32 %v52, %v93
    %v110 = vadd.f32 %v53, %v94
    %v111 = vadd.f32 %v54, %v95
    %v112 = vadd.f32 %v55, %v96
    %v113 = vadd.f32 %v56, %v97
    %v114 = vadd.f32 %v57, %v98
    %v115 = vadd.f32 %v58, %v99
    %v116 = vadd.f32 %v59, %v100
    %v117 = vadd.f32 %v60, %v101
    %v118 = vadd.f32 %v61, %v102
    %v119 = vadd.f32 %v62, %v103
    %v120 = vadd.f32 %v63, %v104
    %v121 = vadd.f32 %v64, %v105
    %v122 = vadd.f32 %v65, %v106
    %v123 = vadd.f32 %v66, %v107
    %124 = vset.pattern.permute.xlu0 2
    %125 = vperm.xlu0 %124, %v12
    %v126 = vpop.permute.xlu0 %125
    %128 = vset.pattern.permute.xlu0 2
    %129 = vperm.xlu0 %128, %v13
    %v130 = vpop.permute.xlu0 %129
    %132 = vset.pattern.permute.xlu0 2
    %133 = vperm.xlu0 %132, %v14
    %v134 = vpop.permute.xlu0 %133
    %136 = vset.pattern.permute.xlu0 2
    %137 = vperm.xlu0 %136, %v15
    %v138 = vpop.permute.xlu0 %137
    %v140 = vadd.f32 %v108, %v126
    %v141 = vadd.f32 %v109, %v126
    %v142 = vadd.f32 %v110, %v126
    %v143 = vadd.f32 %v111, %v126
    %v144 = vadd.f32 %v112, %v130
    %v145 = vadd.f32 %v113, %v130
    %v146 = vadd.f32 %v114, %v130
    %v147 = vadd.f32 %v115, %v130
    %v148 = vadd.f32 %v116, %v134
    %v149 = vadd.f32 %v117, %v134
    %v150 = vadd.f32 %v118, %v134
    %v151 = vadd.f32 %v119, %v134
    %v152 = vadd.f32 %v120, %v138
    %v153 = vadd.f32 %v121, %v138
    %v154 = vadd.f32 %v122, %v138
    %v155 = vadd.f32 %v123, %v138
    %v156 = vtanh.pop %v140
    %v157 = vtanh.pop %v141
    %v158 = vtanh.pop %v142
    %v159 = vtanh.pop %v143
    %v160 = vtanh.pop %v144
    %v161 = vtanh.pop %v145
    %v162 = vtanh.pop %v146
    %v163 = vtanh.pop %v147
    %v164 = vtanh.pop %v148
    %v165 = vtanh.pop %v149
    %v166 = vtanh.pop %v150
    %v167 = vtanh.pop %v151
    %v168 = vtanh.pop %v152
    %v169 = vtanh.pop %v153
    %v170 = vtanh.pop %v154
    %v171 = vtanh.pop %v155
    %172 = vset.pattern.permute.xlu0 3
    %173 = vperm.xlu0 %172, %v12
    %v174 = vpop.permute.xlu0 %173
    %176 = vset.pattern.permute.xlu0 3
    %177 = vperm.xlu0 %176, %v13
    %v178 = vpop.permute.xlu0 %177
    %180 = vset.pattern.permute.xlu0 3
    %181 = vperm.xlu0 %180, %v14
    %v182 = vpop.permute.xlu0 %181
    %184 = vset.pattern.permute.xlu0 3
    %185 = vperm.xlu0 %184, %v15
    %v186 = vpop.permute.xlu0 %185
    %v188 = vmul.f32 %v156, %v174
    %v189 = vmul.f32 %v157, %v174
    %v190 = vmul.f32 %v158, %v174
    %v191 = vmul.f32 %v159, %v174
    %v192 = vmul.f32 %v160, %v178
    %v193 = vmul.f32 %v161, %v178
    %v194 = vmul.f32 %v162, %v178
    %v195 = vmul.f32 %v163, %v178
    %v196 = vmul.f32 %v164, %v182
    %v197 = vmul.f32 %v165, %v182
    %v198 = vmul.f32 %v166, %v182
    %v199 = vmul.f32 %v167, %v182
    %v200 = vmul.f32 %v168, %v186
    %v201 = vmul.f32 %v169, %v186
    %v202 = vmul.f32 %v170, %v186
    %v203 = vmul.f32 %v171, %v186
    %v204 = vadd.f32 %v188, %v192
    %v205 = vadd.f32 %v204, %v196
    %v206 = vadd.f32 %v205, %v200
    %v207 = vrot.slane %v206, 4
    %v208 = vadd.f32 %v206, %v207
    %v209 = vrot.slane %v208, 2
    %v210 = vadd.f32 %v208, %v209
    %v211 = vrot.slane %v210, 1
    %v212 = vadd.f32 %v210, %v211
    %v213 = vadd.f32 %v189, %v193
    %v214 = vadd.f32 %v213, %v197
    %v215 = vadd.f32 %v214, %v201
    %v216 = vrot.slane %v215, 4
    %v217 = vadd.f32 %v215, %v216
    %v218 = vrot.slane %v217, 2
    %v219 = vadd.f32 %v217, %v218
    %v220 = vrot.slane %v219, 1
    %v221 = vadd.f32 %v219, %v220
    %v222 = vadd.f32 %v190, %v194
    %v223 = vadd.f32 %v222, %v198
    %v224 = vadd.f32 %v223, %v202
    %v225 = vrot.slane %v224, 4
    %v226 = vadd.f32 %v224, %v225
    %v227 = vrot.slane %v226, 2
    %v228 = vadd.f32 %v226, %v227
    %v229 = vrot.slane %v228, 1
    %v230 = vadd.f32 %v228, %v229
    %v231 = vadd.f32 %v191, %v195
    %v232 = vadd.f32 %v231, %v199
    %v233 = vadd.f32 %v232, %v203
    %v234 = vrot.slane %v233, 4
    %v235 = vadd.f32 %v233, %v234
    %v236 = vrot.slane %v235, 2
    %v237 = vadd.f32 %v235, %v236
    %v238 = vrot.slane %v237, 1
    %v239 = vadd.f32 %v237, %v238
    %241 = vset.pattern.permute.xlu0 6
    %242 = vperm.xlu0 %241, %v16
    %v243 = vpop.permute.xlu0 %242
    %v245 = vadd.f32 %v212, %v243
    %v246 = vadd.f32 %v221, %v243
    %v247 = vadd.f32 %v230, %v243
    %v248 = vadd.f32 %v239, %v243
    %v249 = vmul.f32 %v156, %v156
    %v250 = vmul.f32 %v157, %v157
    %v251 = vmul.f32 %v158, %v158
    %v252 = vmul.f32 %v159, %v159
    %v253 = vmul.f32 %v160, %v160
    %v254 = vmul.f32 %v161, %v161
    %v255 = vmul.f32 %v162, %v162
    %v256 = vmul.f32 %v163, %v163
    %v257 = vmul.f32 %v164, %v164
    %v258 = vmul.f32 %v165, %v165
    %v259 = vmul.f32 %v166, %v166
    %v260 = vmul.f32 %v167, %v167
    %v261 = vmul.f32 %v168, %v168
    %v262 = vmul.f32 %v169, %v169
    %v263 = vmul.f32 %v170, %v170
    %v264 = vmul.f32 %v171, %v171
    %265 = vset.pattern.permute.xlu0 4
    %266 = vperm.xlu0 %265, %v12
    %v267 = vpop.permute.xlu0 %266
    %269 = vset.pattern.permute.xlu0 4
    %270 = vperm.xlu0 %269, %v13
    %v271 = vpop.permute.xlu0 %270
    %273 = vset.pattern.permute.xlu0 4
    %274 = vperm.xlu0 %273, %v14
    %v275 = vpop.permute.xlu0 %274
    %277 = vset.pattern.permute.xlu0 4
    %278 = vperm.xlu0 %277, %v15
    %v279 = vpop.permute.xlu0 %278
    %v281 = vmul.f32 %v249, %v267
    %v282 = vmul.f32 %v250, %v267
    %v283 = vmul.f32 %v251, %v267
    %v284 = vmul.f32 %v252, %v267
    %v285 = vmul.f32 %v253, %v271
    %v286 = vmul.f32 %v254, %v271
    %v287 = vmul.f32 %v255, %v271
    %v288 = vmul.f32 %v256, %v271
    %v289 = vmul.f32 %v257, %v275
    %v290 = vmul.f32 %v258, %v275
    %v291 = vmul.f32 %v259, %v275
    %v292 = vmul.f32 %v260, %v275
    %v293 = vmul.f32 %v261, %v279
    %v294 = vmul.f32 %v262, %v279
    %v295 = vmul.f32 %v263, %v279
    %v296 = vmul.f32 %v264, %v279
    %v297 = vadd.f32 %v281, %v285
    %v298 = vadd.f32 %v297, %v289
    %v299 = vadd.f32 %v298, %v293
    %v300 = vrot.slane %v299, 4
    %v301 = vadd.f32 %v299, %v300
    %v302 = vrot.slane %v301, 2
    %v303 = vadd.f32 %v301, %v302
    %v304 = vrot.slane %v303, 1
    %v305 = vadd.f32 %v303, %v304
    %v306 = vadd.f32 %v282, %v286
    %v307 = vadd.f32 %v306, %v290
    %v308 = vadd.f32 %v307, %v294
    %v309 = vrot.slane %v308, 4
    %v310 = vadd.f32 %v308, %v309
    %v311 = vrot.slane %v310, 2
    %v312 = vadd.f32 %v310, %v311
    %v313 = vrot.slane %v312, 1
    %v314 = vadd.f32 %v312, %v313
    %v315 = vadd.f32 %v283, %v287
    %v316 = vadd.f32 %v315, %v291
    %v317 = vadd.f32 %v316, %v295
    %v318 = vrot.slane %v317, 4
    %v319 = vadd.f32 %v317, %v318
    %v320 = vrot.slane %v319, 2
    %v321 = vadd.f32 %v319, %v320
    %v322 = vrot.slane %v321, 1
    %v323 = vadd.f32 %v321, %v322
    %v324 = vadd.f32 %v284, %v288
    %v325 = vadd.f32 %v324, %v292
    %v326 = vadd.f32 %v325, %v296
    %v327 = vrot.slane %v326, 4
    %v328 = vadd.f32 %v326, %v327
    %v329 = vrot.slane %v328, 2
    %v330 = vadd.f32 %v328, %v329
    %v331 = vrot.slane %v330, 1
    %v332 = vadd.f32 %v330, %v331
    %334 = vset.pattern.permute.xlu0 6
    %335 = vperm.xlu0 %334, %v17
    %v336 = vpop.permute.xlu0 %335
    %v338 = vsub.f32 %v336, %v305
    %v339 = vsub.f32 %v336, %v314
    %v340 = vsub.f32 %v336, %v323
    %v341 = vsub.f32 %v336, %v332
    %342 = vset.pattern.permute.xlu0 5
    %343 = vperm.xlu0 %342, %v12
    %v344 = vpop.permute.xlu0 %343
    %346 = vset.pattern.permute.xlu0 5
    %347 = vperm.xlu0 %346, %v13
    %v348 = vpop.permute.xlu0 %347
    %350 = vset.pattern.permute.xlu0 5
    %351 = vperm.xlu0 %350, %v14
    %v352 = vpop.permute.xlu0 %351
    %354 = vset.pattern.permute.xlu0 5
    %355 = vperm.xlu0 %354, %v15
    %v356 = vpop.permute.xlu0 %355
    %v358 = vmul.f32 %v249, %v344
    %v359 = vmul.f32 %v250, %v344
    %v360 = vmul.f32 %v251, %v344
    %v361 = vmul.f32 %v252, %v344
    %v362 = vmul.f32 %v253, %v348
    %v363 = vmul.f32 %v254, %v348
    %v364 = vmul.f32 %v255, %v348
    %v365 = vmul.f32 %v256, %v348
    %v366 = vmul.f32 %v257, %v352
    %v367 = vmul.f32 %v258, %v352
    %v368 = vmul.f32 %v259, %v352
    %v369 = vmul.f32 %v260, %v352
    %v370 = vmul.f32 %v261, %v356
    %v371 = vmul.f32 %v262, %v356
    %v372 = vmul.f32 %v263, %v356
    %v373 = vmul.f32 %v264, %v356
    %v374 = vadd.f32 %v358, %v362
    %v375 = vadd.f32 %v374, %v366
    %v376 = vadd.f32 %v375, %v370
    %v377 = vrot.slane %v376, 4
    %v378 = vadd.f32 %v376, %v377
    %v379 = vrot.slane %v378, 2
    %v380 = vadd.f32 %v378, %v379
    %v381 = vrot.slane %v380, 1
    %v382 = vadd.f32 %v380, %v381
    %v383 = vadd.f32 %v359, %v363
    %v384 = vadd.f32 %v383, %v367
    %v385 = vadd.f32 %v384, %v371
    %v386 = vrot.slane %v385, 4
    %v387 = vadd.f32 %v385, %v386
    %v388 = vrot.slane %v387, 2
    %v389 = vadd.f32 %v387, %v388
    %v390 = vrot.slane %v389, 1
    %v391 = vadd.f32 %v389, %v390
    %v392 = vadd.f32 %v360, %v364
    %v393 = vadd.f32 %v392, %v368
    %v394 = vadd.f32 %v393, %v372
    %v395 = vrot.slane %v394, 4
    %v396 = vadd.f32 %v394, %v395
    %v397 = vrot.slane %v396, 2
    %v398 = vadd.f32 %v396, %v397
    %v399 = vrot.slane %v398, 1
    %v400 = vadd.f32 %v398, %v399
    %v401 = vadd.f32 %v361, %v365
    %v402 = vadd.f32 %v401, %v369
    %v403 = vadd.f32 %v402, %v373
    %v404 = vrot.slane %v403, 4
    %v405 = vadd.f32 %v403, %v404
    %v406 = vrot.slane %v405, 2
    %v407 = vadd.f32 %v405, %v406
    %v408 = vrot.slane %v407, 1
    %v409 = vadd.f32 %v407, %v408
    %411 = vset.pattern.permute.xlu0 6
    %412 = vperm.xlu0 %411, %v18
    %v413 = vpop.permute.xlu0 %412
    %v415 = vsub.f32 %v413, %v382
    %v416 = vsub.f32 %v413, %v391
    %v417 = vsub.f32 %v413, %v400
    %v418 = vsub.f32 %v413, %v409
    %v423 = vrot.slane %v246, 7
    %v424 = vrot.slane %v247, 6
    %v425 = vrot.slane %v248, 5
    %vm426 = vcmask 1040384
    %v427 = vsel %vm426, %v245, %v423
    %vm428 = vcmask 1042434
    %v429 = vsel %vm428, %v424, %v425
    %vm430 = vcmask 1041408
    %v431 = vsel %vm430, %v427, %v429
    %v433 = vlaneseq
    %vm434 = vcmp.ge.s32.totalorder %v433, 0
    %vm435 = vcmp.lt.s32.totalorder %v433, 512
    %vm436 = vmand %vm434, %vm435
    %437 = vst.msk [vmem:[#allocation2] ss:$4 sm:$0xf] %vm436, %v431
    %v442 = vrot.slane %v416, 7
    %v443 = vrot.slane %v417, 6
    %v444 = vrot.slane %v418, 5
    %v445 = vsel %vm426, %v415, %v442
    %v446 = vsel %vm428, %v443, %v444
    %v447 = vsel %vm430, %v445, %v446
    %s449 = scalar_lea.vmem [#allocation2], 1
    %450 = vst.msk [vmem:[%s449] ss:$4 sm:$0xf] %vm436, %v447
    %v451 = vsub.f32 0.0, %v338
    %v452 = vsub.f32 0.0, %v339
    %v453 = vsub.f32 0.0, %v340
    %v454 = vsub.f32 0.0, %v341
    %v459 = vrot.slane %v452, 7
    %v460 = vrot.slane %v453, 6
    %v461 = vrot.slane %v454, 5
    %v462 = vsel %vm426, %v451, %v459
    %v463 = vsel %vm428, %v460, %v461
    %v464 = vsel %vm430, %v462, %v463
    %s466 = scalar_lea.vmem [#allocation2], 2
    %467 = vst.msk [vmem:[%s466] ss:$4 sm:$0xf] %vm436, %v464
    // Predicated region
    $region10: #{tpu_custom_call.1} parent=1 // pred_check
      _
    $region11: #{tpu_custom_call.1} parent=1 // pred_check_branch
      %469 = sbr.rel (0) target = $region13
    $region12: #{tpu_custom_call.1} parent=1 // pred_region
      %471 = vsyncadd [#allocation3], 0
      %s473 = sshll.u32 [#allocation2], 4
      %s474 = int_to_ptr.vmem [resolvable:$true] %s473
      %s475 = sshll.u32 %s2, 4
      %s476 = int_to_ptr.hbm [resolvable:$true] %s475
      %478 = dma.vmem_to_hbm [thread:$0]  %s474, 256, %s476, [#allocation3]
    $region13: #{tpu_custom_call.1} parent=1 // pred_fallthru
      _
    // Predicated region
    $region14: #{tpu_custom_call.1} parent=1 // pred_check
      _
    $region15: #{tpu_custom_call.1} parent=1 // pred_check_branch
      %480 = sbr.rel (0) target = $region17
    $region16: #{tpu_custom_call.1} parent=1 // pred_region
      %482 = dma.done [#allocation3], 256
    $region17: #{tpu_custom_call.1} parent=1 // pred_fallthru
      _
    %483 = vsyncpa [#allocation3], 1

</llo_original>
